<compile_context>
chip_gen: v7x
topology: tpu7x:2x2x1
jax: 0.10.0
libtpu: 0.0.40
codegen_flags: <defaults>
</compile_context>

<pallas_src>
import functools

import jax
import jax.numpy as jnp
from jax.experimental import pallas as pl
from jax.experimental.pallas import tpu as pltpu


def _round_up(x, m):
    return ((x + m - 1) // m) * m


def _vq_kernel(z_ref, emb_ref, esqh_ref, zq_ref, idx_ref, hist_ref, *,
               n_valid, tile_n, has_pad):
    """One tile of rows: nearest-codebook search + codebook gather + usage histogram.

    z_ref    : (TN, e_dim)   f32  tile of flattened encoder output
    emb_ref  : (n_e, e_dim)  f32  full codebook (resident every grid step)
    esqh_ref : (1, n_e)      f32  precomputed 0.5*||e_j||^2
    zq_ref   : (TN, e_dim)   f32  quantized rows (out)
    idx_ref  : (1, 1, TN)    i32  argmin codebook index per row, lane-dense (out)
    hist_ref : (1, 1, n_e)   f32  per-tile code-usage histogram (out)
    """
    z = z_ref[...]                       # (TN, e_dim)
    e = emb_ref[...]                     # (n_e, e_dim)

    # cross[i, j] = z_i . e_j  on the MXU (contract over e_dim, no transpose needed).
    cross = jax.lax.dot_general(
        z, e, (((1,), (1,)), ((), ())),
        preferred_element_type=jnp.float32)          # (TN, n_e)

    # argmin_j ||z_i - e_j||^2  ==  argmin_j (0.5*||e_j||^2 - z_i . e_j)
    # (the per-row ||z_i||^2 term is constant per row and cannot change the argmin)
    d = esqh_ref[...] - cross                        # (TN, n_e)
    idx = jnp.argmin(d, axis=1).astype(jnp.int32)    # (TN,)

    # One-hot (kept only in VMEM/vregs; never written to HBM).
    col = jax.lax.broadcasted_iota(jnp.int32, d.shape, 1)     # (TN, n_e)
    onehot = (col == idx[:, None]).astype(jnp.float32)

    # z_q = onehot @ embedding  (MXU gather of the nearest codewords).
    zq = jnp.dot(onehot, e, preferred_element_type=jnp.float32)

    zq_ref[...] = zq.astype(zq_ref.dtype)
    idx_ref[...] = idx.reshape(idx_ref.shape)        # lane-dense index store

    # Code-usage histogram for perplexity; mask out padded tail rows if any.
    hist_src = onehot
    if has_pad:
        row = (jax.lax.broadcasted_iota(jnp.int32, (tile_n, 1), 0)
               + pl.program_id(0) * tile_n)
        hist_src = jnp.where(row < n_valid, onehot, 0.0)
    hist_ref[...] = jnp.sum(hist_src, axis=0).reshape(hist_ref.shape)


def _choose_tile_n(n_rows, e_dim, n_e, requested, vmem_budget_bytes):
    """Pick a row tile: as large as requested, capped by a VMEM budget (v7x-safe)."""
    # Per-row VMEM cost estimate:
    #   double-buffered I/O: z (e_dim f32) + zq (e_dim f32) + idx (1 i32)
    #   live intermediates : ~3 (n_e)-wide f32 rows (cross / d / onehot)
    per_row = 2 * (2 * e_dim * 4 + 4) + 3 * n_e * 4
    cap = max(8, vmem_budget_bytes // per_row)
    t = min(requested, cap, _round_up(n_rows, 8))
    return max(8, (t // 8) * 8)


def vector_quantizer_forward(z_nchw, embedding, beta, *, tile_n=2048,
                             vmem_budget_bytes=24 * 1024 * 1024):
    """Reproduces VectorQuantizer.forward.

    z_nchw    : (B, C, H, W) float32, with C == e_dim
    embedding : (n_e, e_dim) float32 codebook
    returns   : (z_q_nchw, loss, (perplexity, min_encodings, min_encoding_indices))
    """
    B, C, H, W = z_nchw.shape
    n_e, e_dim = embedding.shape
    assert C == e_dim

    # permute_order_in = [0, 2, 3, 1] -> NHWC, then flatten to (N, e_dim)
    z_nhwc = jnp.transpose(z_nchw, (0, 2, 3, 1))
    z_flat = z_nhwc.reshape(-1, e_dim).astype(jnp.float32)
    N = z_flat.shape[0]

    tn = _choose_tile_n(N, e_dim, n_e, tile_n, vmem_budget_bytes)
    N_pad = _round_up(N, tn)
    num_tiles = N_pad // tn
    has_pad = N_pad != N
    if has_pad:
        z_flat = jnp.pad(z_flat, ((0, N_pad - N), (0, 0)))

    emb_f32 = embedding.astype(jnp.float32)
    # Hoisted codebook norm with the factor 2 folded in: 0.5*||e_j||^2.
    e_sq_half = (0.5 * jnp.sum(emb_f32 ** 2, axis=1))[None, :]       # (1, n_e)

    kernel = functools.partial(_vq_kernel, n_valid=N, tile_n=tn, has_pad=has_pad)

    zq_flat, idx_tiles, hist_tiles = pl.pallas_call(
        kernel,
        out_shape=(
            jax.ShapeDtypeStruct((N_pad, e_dim), jnp.float32),
            jax.ShapeDtypeStruct((num_tiles, 1, tn), jnp.int32),
            jax.ShapeDtypeStruct((num_tiles, 1, n_e), jnp.float32),
        ),
        grid_spec=pltpu.PrefetchScalarGridSpec(
            num_scalar_prefetch=0,
            grid=(num_tiles,),
            in_specs=[
                pl.BlockSpec((tn, e_dim), lambda i: (i, 0)),
                pl.BlockSpec((n_e, e_dim), lambda i: (0, 0)),
                pl.BlockSpec((1, n_e), lambda i: (0, 0)),
            ],
            out_specs=[
                pl.BlockSpec((tn, e_dim), lambda i: (i, 0)),
                pl.BlockSpec((1, 1, tn), lambda i: (i, 0, 0)),
                pl.BlockSpec((1, 1, n_e), lambda i: (i, 0, 0)),
            ],
        ),
        compiler_params=pltpu.CompilerParams(
            dimension_semantics=("parallel",),
            vmem_limit_bytes=48 * 1024 * 1024,
        ),
    )(z_flat, emb_f32, e_sq_half)

    z_q_nhwc = zq_flat[:N].reshape(z_nhwc.shape)
    min_idx = idx_tiles.reshape(-1)[:N][:, None]                     # (N, 1) i32

    # Commitment / codebook loss (forward values; stop_gradient mirrors .detach()).
    loss = (jnp.mean((jax.lax.stop_gradient(z_q_nhwc) - z_nhwc) ** 2)
            + beta * jnp.mean((z_q_nhwc - jax.lax.stop_gradient(z_nhwc)) ** 2))

    # Straight-through estimator (numerically z_q in the forward pass).
    z_q_st = z_nhwc + jax.lax.stop_gradient(z_q_nhwc - z_nhwc)

    # Perplexity from the in-kernel histogram (no (N, n_e) HBM writeback needed).
    hist = jnp.sum(hist_tiles.reshape(num_tiles, n_e), axis=0)       # (n_e,)
    e_mean = hist / jnp.float32(N)
    perplexity = jnp.exp(-jnp.sum(e_mean * jnp.log(e_mean + 1e-10)))

    # Full one-hot only for API parity with the PyTorch module; built outside the
    # kernel so XLA dead-code-eliminates it when callers ignore it.
    min_encodings = jax.nn.one_hot(min_idx[:, 0], n_e, dtype=z_nhwc.dtype)

    # permute_order_out = [0, 3, 1, 2] -> back to NCHW
    z_q_nchw = jnp.transpose(z_q_st, (0, 3, 1, 2))
    return z_q_nchw, loss, (perplexity, min_encodings, min_idx)


def _ref_forward(z_nchw, embedding, beta):
    """Pure-JAX reference mirroring the PyTorch module."""
    z_nhwc = jnp.transpose(z_nchw, (0, 2, 3, 1))
    zf = z_nhwc.reshape(-1, embedding.shape[1])
    d = (jnp.sum(zf ** 2, axis=1, keepdims=True)
         + jnp.sum(embedding ** 2, axis=1)
         - 2.0 * zf @ embedding.T)
    idx = jnp.argmin(d, axis=1)
    zq = embedding[idx].reshape(z_nhwc.shape)
    loss = (jnp.mean((jax.lax.stop_gradient(zq) - z_nhwc) ** 2)
            + beta * jnp.mean((zq - jax.lax.stop_gradient(z_nhwc)) ** 2))
    zq_st = z_nhwc + jax.lax.stop_gradient(zq - z_nhwc)
    onehot = jax.nn.one_hot(idx, embedding.shape[0], dtype=jnp.float32)
    e_mean = jnp.mean(onehot, axis=0)
    perp = jnp.exp(-jnp.sum(e_mean * jnp.log(e_mean + 1e-10)))
    return jnp.transpose(zq_st, (0, 3, 1, 2)), loss, perp, idx


if __name__ == "__main__":
    # Module hyperparameters (small, consistent with the forward's assumptions).
    n_e = 64       # number of codebook entries
    e_dim = 16     # embedding / channel dimension
    beta = 0.25

    key = jax.random.PRNGKey(0)
    k_emb, k_z = jax.random.split(key)

    # nn.Embedding(n_e, e_dim).weight.uniform_(-1/n_e, 1/n_e), deterministic init.
    embedding = jax.random.uniform(
        k_emb, (n_e, e_dim), dtype=jnp.float32,
        minval=-1.0 / n_e, maxval=1.0 / n_e)

    # Case 1: divisible row count.  Case 2: N=30, exercises the padded tail path.
    for case_i, (B, H, W) in enumerate([(2, 8, 8), (1, 5, 6)]):
        kz = jax.random.fold_in(k_z, case_i)
        z = jax.random.normal(kz, (B, e_dim, H, W), dtype=jnp.float32)

        z_q, loss, (perplexity, min_encodings, min_indices) = jax.block_until_ready(
            vector_quantizer_forward(z, embedding, beta))

        zq_ref, loss_ref, perp_ref, idx_ref = _ref_forward(z, embedding, beta)
        n_rows = B * H * W
        assert z_q.shape == z.shape
        assert min_indices.shape == (n_rows, 1)
        assert min_encodings.shape == (n_rows, n_e)
        assert bool(jnp.all(min_indices[:, 0] == idx_ref))
        assert float(jnp.max(jnp.abs(z_q - zq_ref))) < 1e-5
        assert abs(float(loss - loss_ref)) < 1e-6
        assert abs(float(perplexity - perp_ref)) < 1e-4

    print("KERNEL_OK")
</pallas_src>

<mosaic_0001>
module attributes {stable_mosaic.version = 11 : i64} {
  func.func @_vq_kernel(%arg0: i32, %arg1: memref<128x16xf32, #tpu.memory_space<vmem>>, %arg2: memref<64x16xf32, #tpu.memory_space<vmem>>, %arg3: memref<1x64xf32, #tpu.memory_space<vmem>>, %arg4: memref<128x16xf32, #tpu.memory_space<vmem>>, %arg5: memref<1x1x128xi32, #tpu.memory_space<vmem>>, %arg6: memref<1x1x64xf32, #tpu.memory_space<vmem>>) attributes {dimension_semantics = [#tpu.dimension_semantics<parallel>], iteration_bounds = array<i64: 1>, scalar_prefetch = 0 : i64, scratch_operands = 0 : i64, tpu.core_type = #tpu.core_type<tc>, window_params = [{transform_indices = @transform_0, window_bounds = array<i64: 128, 16>}, {pipeline_mode = #tpu.pipeline_mode<synchronous>, transform_indices = @transform_1, window_bounds = array<i64: 64, 16>}, {pipeline_mode = #tpu.pipeline_mode<synchronous>, transform_indices = @transform_2, window_bounds = array<i64: 1, 64>}, {transform_indices = @transform_3, window_bounds = array<i64: 128, 16>}, {transform_indices = @transform_4, window_bounds = array<i64: 1, 1, 128>}, {transform_indices = @transform_5, window_bounds = array<i64: 1, 1, 64>}]} {
    %c0 = arith.constant 0 : index
    %c0_0 = arith.constant 0 : index
    %0 = vector.load %arg1[%c0, %c0_0] : memref<128x16xf32, #tpu.memory_space<vmem>>, vector<128x16xf32>
    %c0_1 = arith.constant 0 : index
    %c0_2 = arith.constant 0 : index
    %1 = vector.load %arg2[%c0_1, %c0_2] : memref<64x16xf32, #tpu.memory_space<vmem>>, vector<64x16xf32>
    %cst = arith.constant dense<0.000000e+00> : vector<128x64xf32>
    %2 = tpu.matmul %0, %1, %cst {dimension_numbers = #tpu.dot_dimension_numbers<[1], [1], [0], [0], [0, 0, 1, 0], [], []>} : vector<128x16xf32>, vector<64x16xf32>, vector<128x64xf32> -> vector<128x64xf32>
    %c0_3 = arith.constant 0 : index
    %c0_4 = arith.constant 0 : index
    %3 = vector.load %arg3[%c0_3, %c0_4] : memref<1x64xf32, #tpu.memory_space<vmem>>, vector<1x64xf32>
    %4 = vector.broadcast %3 : vector<1x64xf32> to vector<128x64xf32>
    %5 = arith.subf %4, %2 : vector<128x64xf32>
    %6 = tpu.reduce_index %5 {axis = 1 : i32, kind = #tpu.reduction_kind<arg_min>} : vector<128x64xf32> -> vector<128xi32>
    %7 = tpu.iota {dimensions = array<i32: 1>} : vector<128x64xi32>
    %8 = vector.shape_cast %6 : vector<128xi32> to vector<128x1xi32>
    %9 = vector.broadcast %8 : vector<128x1xi32> to vector<128x64xi32>
    %10 = arith.cmpi eq, %7, %9 : vector<128x64xi32>
    %11 = arith.extui %10 : vector<128x64xi1> to vector<128x64xi32>
    %12 = arith.sitofp %11 : vector<128x64xi32> to vector<128x64xf32>
    %cst_5 = arith.constant dense<0.000000e+00> : vector<128x16xf32>
    %13 = tpu.matmul %12, %1, %cst_5 {dimension_numbers = #tpu.dot_dimension_numbers<[1], [0], [0], [1], [0, 0, 1, 1], [], []>} : vector<128x64xf32>, vector<64x16xf32>, vector<128x16xf32> -> vector<128x16xf32>
    %c0_6 = arith.constant 0 : index
    %c0_7 = arith.constant 0 : index
    %14 = vector.load %arg4[%c0_6, %c0_7] : memref<128x16xf32, #tpu.memory_space<vmem>>, vector<128x16xf32>
    tpu.vector_store %arg4[%c0_6, %c0_7], %13 {strides = array<i32>} : memref<128x16xf32, #tpu.memory_space<vmem>>, vector<128x16xf32>,
    %15 = vector.shape_cast %6 : vector<128xi32> to vector<1x1x128xi32>
    %c0_8 = arith.constant 0 : index
    %c0_9 = arith.constant 0 : index
    %c0_10 = arith.constant 0 : index
    %16 = vector.load %arg5[%c0_8, %c0_9, %c0_10] : memref<1x1x128xi32, #tpu.memory_space<vmem>>, vector<1x1x128xi32>
    tpu.vector_store %arg5[%c0_8, %c0_9, %c0_10], %15 {strides = array<i32>} : memref<1x1x128xi32, #tpu.memory_space<vmem>>, vector<1x1x128xi32>,
    %cst_11 = arith.constant dense<0.000000e+00> : vector<64xf32>
    %17 = vector.multi_reduction <add>, %12, %cst_11 [0] : vector<128x64xf32> to vector<64xf32>
    %18 = vector.shape_cast %17 : vector<64xf32> to vector<1x1x64xf32>
    %c0_12 = arith.constant 0 : index
    %c0_13 = arith.constant 0 : index
    %c0_14 = arith.constant 0 : index
    %19 = vector.load %arg6[%c0_12, %c0_13, %c0_14] : memref<1x1x64xf32, #tpu.memory_space<vmem>>, vector<1x1x64xf32>
    tpu.vector_store %arg6[%c0_12, %c0_13, %c0_14], %18 {strides = array<i32>} : memref<1x1x64xf32, #tpu.memory_space<vmem>>, vector<1x1x64xf32>,
    return
  }
  func.func @transform_0(%arg0: i32) -> (i32, i32) {
    %c0_i32 = arith.constant 0 : i32
    %c0_i32_0 = arith.constant 0 : i32
    return %arg0, %c0_i32 : i32, i32
  }
  func.func @transform_1(%arg0: i32) -> (i32, i32) {
    %c0_i32 = arith.constant 0 : i32
    %c0_i32_0 = arith.constant 0 : i32
    %c0_i32_1 = arith.constant 0 : i32
    return %c0_i32, %c0_i32_0 : i32, i32
  }
  func.func @transform_2(%arg0: i32) -> (i32, i32) {
    %c0_i32 = arith.constant 0 : i32
    %c0_i32_0 = arith.constant 0 : i32
    %c0_i32_1 = arith.constant 0 : i32
    return %c0_i32, %c0_i32_0 : i32, i32
  }
  func.func @transform_3(%arg0: i32) -> (i32, i32) {
    %c0_i32 = arith.constant 0 : i32
    %c0_i32_0 = arith.constant 0 : i32
    return %arg0, %c0_i32 : i32, i32
  }
  func.func @transform_4(%arg0: i32) -> (i32, i32, i32) {
    %c0_i32 = arith.constant 0 : i32
    %c0_i32_0 = arith.constant 0 : i32
    %c0_i32_1 = arith.constant 0 : i32
    return %arg0, %c0_i32, %c0_i32_0 : i32, i32, i32
  }
  func.func @transform_5(%arg0: i32) -> (i32, i32, i32) {
    %c0_i32 = arith.constant 0 : i32
    %c0_i32_0 = arith.constant 0 : i32
    %c0_i32_1 = arith.constant 0 : i32
    return %arg0, %c0_i32, %c0_i32_0 : i32, i32, i32
  }
}

</mosaic_0001>

<llo_original>
// kernel: tpu_custom_call.1
$region0: #{tpu_custom_call.1}
  #allocation0 [shape = 'u32[]', space=smem, size = 0x4, offset = 0x4, fixed_abs, tag = 'smem constant byte address 0x4 - core index']
  #allocation1 [shape = 'u32[144,128]{1,0:T(1,128)}', space=vmem, size = 0x12000, scoped, tag = 'internal scratch']
  %s0 = inlined_call_operand.vmem [shape: f32[128,16], index: 0, kind: input, shape index: {}]
  %s1 = inlined_call_operand.vmem [shape: f32[64,16], index: 1, kind: input, shape index: {}]
  %s2 = inlined_call_operand.vmem [shape: f32[1,64], index: 2, kind: input, shape index: {}]
  %s3 = inlined_call_operand.vmem [shape: f32[128,16], index: 3, kind: output, shape index: {0}]
  %s4 = inlined_call_operand.hbm [shape: s32[1,1,128], index: 4, kind: output, shape index: {1}]
  %s5 = inlined_call_operand.hbm [shape: f32[1,1,64], index: 5, kind: output, shape index: {2}]
  %6 = xla_tuple %s3, %s4, %s5
  %s7 = sld [smem:[#allocation0]]
  $region38: #{tpu_custom_call.1} parent=0
    _
  %s9 = ssub.s32 1, %s7
  %s10 = scalar_select 0, %s9, %s7
  $region1: #{tpu_custom_call.1} parent=0
    #allocation2 [shape = 'u8[512]{0}', space=vmem, size = 0x400, scoped, tag = 'output window, operand 1, single buffered']
    #allocation3 [shape = 's32[1]{0}', space=sflag, size = 0x4, scoped, tag = 'scoped memory for tpu_custom_call.1']
    #allocation4 [shape = 'u8[512]{0}', space=vmem, size = 0x400, scoped, tag = 'output window, operand 2, single buffered']
    #allocation5 [shape = 's32[1]{0}', space=sflag, size = 0x4, scoped, tag = 'scoped memory for tpu_custom_call.1']
    %11 = vsyncpa [#allocation3], 0
    %12 = vsyncpa [#allocation5], 0
    // Predicated region
    $region2: #{tpu_custom_call.1} parent=1 // pred_check
      _
    $region3: #{tpu_custom_call.1} parent=1 // pred_check_branch
      %14 = sbr.rel (0) target = $region5
    $region4: #{tpu_custom_call.1} parent=1 // pred_region
      _
    $region5: #{tpu_custom_call.1} parent=1 // pred_fallthru
      _
    // Predicated region
    $region6: #{tpu_custom_call.1} parent=1 // pred_check
      _
    $region7: #{tpu_custom_call.1} parent=1 // pred_check_branch
      %16 = sbr.rel (0) target = $region9
    $region8: #{tpu_custom_call.1} parent=1 // pred_region
      _
    $region9: #{tpu_custom_call.1} parent=1 // pred_fallthru
      _
    // Predicated region
    $region10: #{tpu_custom_call.1} parent=1 // pred_check
      _
    $region11: #{tpu_custom_call.1} parent=1 // pred_check_branch
      %18 = sbr.rel (0) target = $region13
    $region12: #{tpu_custom_call.1} parent=1 // pred_region
      _
    $region13: #{tpu_custom_call.1} parent=1 // pred_fallthru
      _
    %v19 = vld [vmem:[%s0] sm:$0xff]
    %v20 = vld [vmem:[%s0 + $0x8] sm:$0xff]
    %v21 = vld [vmem:[%s0 + $0x10] sm:$0xff]
    %v22 = vld [vmem:[%s0 + $0x18] sm:$0xff]
    %v23 = vld [vmem:[%s0 + $0x20] sm:$0xff]
    %v24 = vld [vmem:[%s0 + $0x28] sm:$0xff]
    %v25 = vld [vmem:[%s0 + $0x30] sm:$0xff]
    %v26 = vld [vmem:[%s0 + $0x38] sm:$0xff]
    %v27 = vld [vmem:[%s0 + $0x40] sm:$0xff]
    %v28 = vld [vmem:[%s0 + $0x48] sm:$0xff]
    %v29 = vld [vmem:[%s0 + $0x50] sm:$0xff]
    %v30 = vld [vmem:[%s0 + $0x58] sm:$0xff]
    %v31 = vld [vmem:[%s0 + $0x60] sm:$0xff]
    %v32 = vld [vmem:[%s0 + $0x68] sm:$0xff]
    %v33 = vld [vmem:[%s0 + $0x70] sm:$0xff]
    %v34 = vld [vmem:[%s0 + $0x78] sm:$0xff]
    %v35 = vld [vmem:[%s1] sm:$0xff]
    %v36 = vld [vmem:[%s1 + $0x8] sm:$0xff]
    %v37 = vld [vmem:[%s1 + $0x10] sm:$0xff]
    %v38 = vld [vmem:[%s1 + $0x18] sm:$0xff]
    %v39 = vld [vmem:[%s1 + $0x20] sm:$0xff]
    %v40 = vld [vmem:[%s1 + $0x28] sm:$0xff]
    %v41 = vld [vmem:[%s1 + $0x30] sm:$0xff]
    %v42 = vld [vmem:[%s1 + $0x38] sm:$0xff]
    %vm43 = vcmask 130048
    %v45 = vsel %vm43, %v19, 0
    %v48 = vsel %vm43, %v20, 0
    %v51 = vsel %vm43, %v21, 0
    %v54 = vsel %vm43, %v22, 0
    %v57 = vsel %vm43, %v23, 0
    %v60 = vsel %vm43, %v24, 0
    %v63 = vsel %vm43, %v25, 0
    %v66 = vsel %vm43, %v26, 0
    %v69 = vsel %vm43, %v27, 0
    %v72 = vsel %vm43, %v28, 0
    %v75 = vsel %vm43, %v29, 0
    %v78 = vsel %vm43, %v30, 0
    %v81 = vsel %vm43, %v31, 0
    %v84 = vsel %vm43, %v32, 0
    %v87 = vsel %vm43, %v33, 0
    %v90 = vsel %vm43, %v34, 0
    %v93 = vsel %vm43, %v35, 0
    %v96 = vsel %vm43, %v36, 0
    %v99 = vsel %vm43, %v37, 0
    %v102 = vsel %vm43, %v38, 0
    %v105 = vsel %vm43, %v39, 0
    %v108 = vsel %vm43, %v40, 0
    %v111 = vsel %vm43, %v41, 0
    %v114 = vsel %vm43, %v42, 0
    %116 = vmatprep.subr.mxu0 0.0
    %117 = vmatpush1.xpose.msra.mxu0 %v93
    %118 = vmatprep.subr.mxu0 0.0
    %119 = vmatpush1.xpose.msra.mxu0 %v96
    %120 = vmatprep.subr.mxu0 0.0
    %121 = vmatpush1.xpose.msra.mxu0 %v99
    %122 = vmatprep.subr.mxu0 0.0
    %123 = vmatpush1.xpose.msra.mxu0 %v102
    %124 = vmatprep.subr.mxu0 0.0
    %125 = vmatpush1.xpose.msra.mxu0 %v105
    %126 = vmatprep.subr.mxu0 0.0
    %127 = vmatpush1.xpose.msra.mxu0 %v108
    %128 = vmatprep.subr.mxu0 0.0
    %129 = vmatpush1.xpose.msra.mxu0 %v111
    %130 = vmatprep.subr.mxu0 0.0
    %131 = vmatpush1.xpose.msra.mxu0 %v114
    %132 = vmatprep.subr.mxu0 0.0
    %133 = vmatpush1.xpose.msra.mxu0 0.0
    %134 = vmatprep.subr.mxu0 0.0
    %135 = vmatpush1.xpose.msra.mxu0 0.0
    %136 = vmatprep.subr.mxu0 0.0
    %137 = vmatpush1.xpose.msra.mxu0 0.0
    %138 = vmatprep.subr.mxu0 0.0
    %139 = vmatpush1.xpose.msra.mxu0 0.0
    %140 = vmatprep.subr.mxu0 0.0
    %141 = vmatpush1.xpose.msra.mxu0 0.0
    %142 = vmatprep.subr.mxu0 0.0
    %143 = vmatpush1.xpose.msra.mxu0 0.0
    %144 = vmatprep.subr.mxu0 0.0
    %145 = vmatpush1.xpose.msra.mxu0 0.0
    %146 = vmatprep.subr.mxu0 0.0
    %147 = vmatpush1.xpose.msra.mxu0 0.0
    %148 = vmatprep.subr.mxu0 0.0
    %149 = vmatpush1.xpose.msra.mxu0 0.0
    %150 = vmatprep.subr.mxu0 0.0
    %151 = vmatpush1.xpose.msra.mxu0 0.0
    %152 = vmatprep.subr.mxu0 0.0
    %153 = vmatpush1.xpose.msra.mxu0 0.0
    %154 = vmatprep.subr.mxu0 0.0
    %155 = vmatpush1.xpose.msra.mxu0 0.0
    %156 = vmatprep.subr.mxu0 0.0
    %157 = vmatpush1.xpose.msra.mxu0 0.0
    %158 = vmatprep.subr.mxu0 0.0
    %159 = vmatpush1.xpose.msra.mxu0 0.0
    %160 = vmatprep.subr.mxu0 0.0
    %161 = vmatpush1.xpose.msra.mxu0 0.0
    %162 = vmatprep.subr.mxu0 0.0
    %163 = vmatpush1.xpose.msra.mxu0 0.0
    %164 = vmatprep.subr.mxu0 0.0
    %165 = vmatpush1.xpose.msra.mxu0 0.0
    %166 = vmatprep.subr.mxu0 0.0
    %167 = vmatpush1.xpose.msra.mxu0 0.0
    %168 = vmatprep.subr.mxu0 0.0
    %169 = vmatpush1.xpose.msra.mxu0 0.0
    %170 = vmatprep.subr.mxu0 0.0
    %171 = vmatpush1.xpose.msra.mxu0 0.0
    %172 = vmatprep.subr.mxu0 0.0
    %173 = vmatpush1.xpose.msra.mxu0 0.0
    %174 = vmatprep.subr.mxu0 0.0
    %175 = vmatpush1.xpose.msra.mxu0 0.0
    %176 = vmatprep.subr.mxu0 0.0
    %177 = vmatpush1.xpose.msra.mxu0 0.0
    %178 = vmatprep.subr.mxu0 0.0
    %179 = vmatpush1.xpose.msra.mxu0 0.0
    %180 = vmatprep.mubr.f32.mxu0 0.0
    %181 = vmatmul.mubr.f32.gmra.mrb[0].mxu0 %v45
    %v182 = vpop.f32.mrb[0].mxu0
    %v183 = vadd.f32 0.0, %v182
    %v184 = vpop.f32.mrb[0].mxu0
    %185 = vmatprep.mubr.f32.mxu0 0.0
    %186 = vmatmul.mubr.f32.gmra.mrb[0].mxu0 %v48
    %v187 = vpop.f32.mrb[0].mxu0
    %v188 = vadd.f32 0.0, %v187
    %v189 = vpop.f32.mrb[0].mxu0
    %190 = vmatprep.mubr.f32.mxu0 0.0
    %191 = vmatmul.mubr.f32.gmra.mrb[0].mxu0 %v51
    %v192 = vpop.f32.mrb[0].mxu0
    %v193 = vadd.f32 0.0, %v192
    %v194 = vpop.f32.mrb[0].mxu0
    %195 = vmatprep.mubr.f32.mxu0 0.0
    %196 = vmatmul.mubr.f32.gmra.mrb[0].mxu0 %v54
    %v197 = vpop.f32.mrb[0].mxu0
    %v198 = vadd.f32 0.0, %v197
    %v199 = vpop.f32.mrb[0].mxu0
    %200 = vmatprep.mubr.f32.mxu0 0.0
    %201 = vmatmul.mubr.f32.gmra.mrb[0].mxu0 %v57
    %v202 = vpop.f32.mrb[0].mxu0
    %v203 = vadd.f32 0.0, %v202
    %v204 = vpop.f32.mrb[0].mxu0
    %205 = vmatprep.mubr.f32.mxu0 0.0
    %206 = vmatmul.mubr.f32.gmra.mrb[0].mxu0 %v60
    %v207 = vpop.f32.mrb[0].mxu0
    %v208 = vadd.f32 0.0, %v207
    %v209 = vpop.f32.mrb[0].mxu0
    %210 = vmatprep.mubr.f32.mxu0 0.0
    %211 = vmatmul.mubr.f32.gmra.mrb[0].mxu0 %v63
    %v212 = vpop.f32.mrb[0].mxu0
    %v213 = vadd.f32 0.0, %v212
    %v214 = vpop.f32.mrb[0].mxu0
    %215 = vmatprep.mubr.f32.mxu0 0.0
    %216 = vmatmul.mubr.f32.gmra.mrb[0].mxu0 %v66
    %v217 = vpop.f32.mrb[0].mxu0
    %v218 = vadd.f32 0.0, %v217
    %v219 = vpop.f32.mrb[0].mxu0
    %220 = vmatprep.mubr.f32.mxu0 0.0
    %221 = vmatmul.mubr.f32.gmra.mrb[0].mxu0 %v69
    %v222 = vpop.f32.mrb[0].mxu0
    %v223 = vadd.f32 0.0, %v222
    %v224 = vpop.f32.mrb[0].mxu0
    %225 = vmatprep.mubr.f32.mxu0 0.0
    %226 = vmatmul.mubr.f32.gmra.mrb[0].mxu0 %v72
    %v227 = vpop.f32.mrb[0].mxu0
    %v228 = vadd.f32 0.0, %v227
    %v229 = vpop.f32.mrb[0].mxu0
    %230 = vmatprep.mubr.f32.mxu0 0.0
    %231 = vmatmul.mubr.f32.gmra.mrb[0].mxu0 %v75
    %v232 = vpop.f32.mrb[0].mxu0
    %v233 = vadd.f32 0.0, %v232
    %v234 = vpop.f32.mrb[0].mxu0
    %235 = vmatprep.mubr.f32.mxu0 0.0
    %236 = vmatmul.mubr.f32.gmra.mrb[0].mxu0 %v78
    %v237 = vpop.f32.mrb[0].mxu0
    %v238 = vadd.f32 0.0, %v237
    %v239 = vpop.f32.mrb[0].mxu0
    %240 = vmatprep.mubr.f32.mxu0 0.0
    %241 = vmatmul.mubr.f32.gmra.mrb[0].mxu0 %v81
    %v242 = vpop.f32.mrb[0].mxu0
    %v243 = vadd.f32 0.0, %v242
    %v244 = vpop.f32.mrb[0].mxu0
    %245 = vmatprep.mubr.f32.mxu0 0.0
    %246 = vmatmul.mubr.f32.gmra.mrb[0].mxu0 %v84
    %v247 = vpop.f32.mrb[0].mxu0
    %v248 = vadd.f32 0.0, %v247
    %v249 = vpop.f32.mrb[0].mxu0
    %250 = vmatprep.mubr.f32.mxu0 0.0
    %251 = vmatmul.mubr.f32.gmra.mrb[0].mxu0 %v87
    %v252 = vpop.f32.mrb[0].mxu0
    %v253 = vadd.f32 0.0, %v252
    %v254 = vpop.f32.mrb[0].mxu0
    %255 = vmatprep.mubr.f32.mxu0 0.0
    %256 = vmatmul.mubr.f32.gmra.mrb[0].mxu0 %v90
    %v257 = vpop.f32.mrb[0].mxu0
    %v258 = vadd.f32 0.0, %v257
    %v259 = vpop.f32.mrb[0].mxu0
    %260 = vdwg.mxu0
    %v261 = vld [vmem:[%s2] sm:$0x1]
    %v263 = vlaneseq
    %v264 = vshrl.u32 %v263, 7
    %v265 = vsub.s32 0, %v264
    %v266 = vrot.slane %v261, %v265
    %v268 = vsub.f32 %v266, %v183
    %v269 = vsub.f32 %v266, %v188
    %v270 = vsub.f32 %v266, %v193
    %v271 = vsub.f32 %v266, %v198
    %v272 = vsub.f32 %v266, %v203
    %v273 = vsub.f32 %v266, %v208
    %v274 = vsub.f32 %v266, %v213
    %v275 = vsub.f32 %v266, %v218
    %v276 = vsub.f32 %v266, %v223
    %v277 = vsub.f32 %v266, %v228
    %v278 = vsub.f32 %v266, %v233
    %v279 = vsub.f32 %v266, %v238
    %v280 = vsub.f32 %v266, %v243
    %v281 = vsub.f32 %v266, %v248
    %v282 = vsub.f32 %v266, %v253
    %v283 = vsub.f32 %v266, %v258
    %vm284 = vcmask 523264
    %v285 = vsel %vm284, %v268, inf
    %286 = vmin.index.xlane.f32.xlu0 %v285
    %v287 = vpop.xlane.xlu0 %286
    %v288 = vsel %vm284, %v269, inf
    %289 = vmin.index.xlane.f32.xlu0 %v288
    %v290 = vpop.xlane.xlu0 %289
    %v291 = vsel %vm284, %v270, inf
    %292 = vmin.index.xlane.f32.xlu0 %v291
    %v293 = vpop.xlane.xlu0 %292
    %v294 = vsel %vm284, %v271, inf
    %295 = vmin.index.xlane.f32.xlu0 %v294
    %v296 = vpop.xlane.xlu0 %295
    %v297 = vsel %vm284, %v272, inf
    %298 = vmin.index.xlane.f32.xlu0 %v297
    %v299 = vpop.xlane.xlu0 %298
    %v300 = vsel %vm284, %v273, inf
    %301 = vmin.index.xlane.f32.xlu0 %v300
    %v302 = vpop.xlane.xlu0 %301
    %v303 = vsel %vm284, %v274, inf
    %304 = vmin.index.xlane.f32.xlu0 %v303
    %v305 = vpop.xlane.xlu0 %304
    %v306 = vsel %vm284, %v275, inf
    %307 = vmin.index.xlane.f32.xlu0 %v306
    %v308 = vpop.xlane.xlu0 %307
    %v309 = vsel %vm284, %v276, inf
    %310 = vmin.index.xlane.f32.xlu0 %v309
    %v311 = vpop.xlane.xlu0 %310
    %v312 = vsel %vm284, %v277, inf
    %313 = vmin.index.xlane.f32.xlu0 %v312
    %v314 = vpop.xlane.xlu0 %313
    %v315 = vsel %vm284, %v278, inf
    %316 = vmin.index.xlane.f32.xlu0 %v315
    %v317 = vpop.xlane.xlu0 %316
    %v318 = vsel %vm284, %v279, inf
    %319 = vmin.index.xlane.f32.xlu0 %v318
    %v320 = vpop.xlane.xlu0 %319
    %v321 = vsel %vm284, %v280, inf
    %322 = vmin.index.xlane.f32.xlu0 %v321
    %v323 = vpop.xlane.xlu0 %322
    %v324 = vsel %vm284, %v281, inf
    %325 = vmin.index.xlane.f32.xlu0 %v324
    %v326 = vpop.xlane.xlu0 %325
    %v327 = vsel %vm284, %v282, inf
    %328 = vmin.index.xlane.f32.xlu0 %v327
    %v329 = vpop.xlane.xlu0 %328
    %v330 = vsel %vm284, %v283, inf
    %331 = vmin.index.xlane.f32.xlu0 %v330
    %v332 = vpop.xlane.xlu0 %331
    %v333 = vlaneseq
    %v334 = vand.u32 %v333, 127
    %vm335 = vcmp.eq.s32.totalorder %v334, %v287
    %vm336 = vcmp.eq.s32.totalorder %v334, %v290
    %vm337 = vcmp.eq.s32.totalorder %v334, %v293
    %vm338 = vcmp.eq.s32.totalorder %v334, %v296
    %vm339 = vcmp.eq.s32.totalorder %v334, %v299
    %vm340 = vcmp.eq.s32.totalorder %v334, %v302
    %vm341 = vcmp.eq.s32.totalorder %v334, %v305
    %vm342 = vcmp.eq.s32.totalorder %v334, %v308
    %vm343 = vcmp.eq.s32.totalorder %v334, %v311
    %vm344 = vcmp.eq.s32.totalorder %v334, %v314
    %vm345 = vcmp.eq.s32.totalorder %v334, %v317
    %vm346 = vcmp.eq.s32.totalorder %v334, %v320
    %vm347 = vcmp.eq.s32.totalorder %v334, %v323
    %vm348 = vcmp.eq.s32.totalorder %v334, %v326
    %vm349 = vcmp.eq.s32.totalorder %v334, %v329
    %vm350 = vcmp.eq.s32.totalorder %v334, %v332
    %v351 = vsel %vm335, 1, 0
    %v352 = vsel %vm336, 1, 0
    %v353 = vsel %vm337, 1, 0
    %v354 = vsel %vm338, 1, 0
    %v355 = vsel %vm339, 1, 0
    %v356 = vsel %vm340, 1, 0
    %v357 = vsel %vm341, 1, 0
    %v358 = vsel %vm342, 1, 0
    %v359 = vsel %vm343, 1, 0
    %v360 = vsel %vm344, 1, 0
    %v361 = vsel %vm345, 1, 0
    %v362 = vsel %vm346, 1, 0
    %v363 = vsel %vm347, 1, 0
    %v364 = vsel %vm348, 1, 0
    %v365 = vsel %vm349, 1, 0
    %v366 = vsel %vm350, 1, 0
    %v367 = vcvt.s32.f32 %v351
    %v368 = vcvt.s32.f32 %v352
    %v369 = vcvt.s32.f32 %v353
    %v370 = vcvt.s32.f32 %v354
    %v371 = vcvt.s32.f32 %v355
    %v372 = vcvt.s32.f32 %v356
    %v373 = vcvt.s32.f32 %v357
    %v374 = vcvt.s32.f32 %v358
    %v375 = vcvt.s32.f32 %v359
    %v376 = vcvt.s32.f32 %v360
    %v377 = vcvt.s32.f32 %v361
    %v378 = vcvt.s32.f32 %v362
    %v379 = vcvt.s32.f32 %v363
    %v380 = vcvt.s32.f32 %v364
    %v381 = vcvt.s32.f32 %v365
    %v382 = vcvt.s32.f32 %v366
    %v384 = vsel %vm284, %v367, 0
    %v387 = vsel %vm284, %v368, 0
    %v390 = vsel %vm284, %v369, 0
    %v393 = vsel %vm284, %v370, 0
    %v396 = vsel %vm284, %v371, 0
    %v399 = vsel %vm284, %v372, 0
    %v402 = vsel %vm284, %v373, 0
    %v405 = vsel %vm284, %v374, 0
    %v408 = vsel %vm284, %v375, 0
    %v411 = vsel %vm284, %v376, 0
    %v414 = vsel %vm284, %v377, 0
    %v417 = vsel %vm284, %v378, 0
    %v420 = vsel %vm284, %v379, 0
    %v423 = vsel %vm284, %v380, 0
    %v426 = vsel %vm284, %v381, 0
    %v429 = vsel %vm284, %v382, 0
    %431 = vmatprep.subr.mxu0 0.0
    %432 = vmatpush1.msra.mxu0 %v35
    %433 = vmatprep.subr.mxu0 0.0
    %434 = vmatpush1.msra.mxu0 %v36
    %435 = vmatprep.subr.mxu0 0.0
    %436 = vmatpush1.msra.mxu0 %v37
    %437 = vmatprep.subr.mxu0 0.0
    %438 = vmatpush1.msra.mxu0 %v38
    %439 = vmatprep.subr.mxu0 0.0
    %440 = vmatpush1.msra.mxu0 %v39
    %441 = vmatprep.subr.mxu0 0.0
    %442 = vmatpush1.msra.mxu0 %v40
    %443 = vmatprep.subr.mxu0 0.0
    %444 = vmatpush1.msra.mxu0 %v41
    %445 = vmatprep.subr.mxu0 0.0
    %446 = vmatpush1.msra.mxu0 %v42
    %447 = vmatprep.subr.mxu0 0.0
    %448 = vmatpush1.msra.mxu0 0.0
    %449 = vmatprep.subr.mxu0 0.0
    %450 = vmatpush1.msra.mxu0 0.0
    %451 = vmatprep.subr.mxu0 0.0
    %452 = vmatpush1.msra.mxu0 0.0
    %453 = vmatprep.subr.mxu0 0.0
    %454 = vmatpush1.msra.mxu0 0.0
    %455 = vmatprep.subr.mxu0 0.0
    %456 = vmatpush1.msra.mxu0 0.0
    %457 = vmatprep.subr.mxu0 0.0
    %458 = vmatpush1.msra.mxu0 0.0
    %459 = vmatprep.subr.mxu0 0.0
    %460 = vmatpush1.msra.mxu0 0.0
    %461 = vmatprep.subr.mxu0 0.0
    %462 = vmatpush1.msra.mxu0 0.0
    %463 = vmatprep.subr.mxu0 0.0
    %464 = vmatpush1.msra.mxu0 0.0
    %465 = vmatprep.subr.mxu0 0.0
    %466 = vmatpush1.msra.mxu0 0.0
    %467 = vmatprep.subr.mxu0 0.0
    %468 = vmatpush1.msra.mxu0 0.0
    %469 = vmatprep.subr.mxu0 0.0
    %470 = vmatpush1.msra.mxu0 0.0
    %471 = vmatprep.subr.mxu0 0.0
    %472 = vmatpush1.msra.mxu0 0.0
    %473 = vmatprep.subr.mxu0 0.0
    %474 = vmatpush1.msra.mxu0 0.0
    %475 = vmatprep.subr.mxu0 0.0
    %476 = vmatpush1.msra.mxu0 0.0
    %477 = vmatprep.subr.mxu0 0.0
    %478 = vmatpush1.msra.mxu0 0.0
    %479 = vmatprep.subr.mxu0 0.0
    %480 = vmatpush1.msra.mxu0 0.0
    %481 = vmatprep.subr.mxu0 0.0
    %482 = vmatpush1.msra.mxu0 0.0
    %483 = vmatprep.subr.mxu0 0.0
    %484 = vmatpush1.msra.mxu0 0.0
    %485 = vmatprep.subr.mxu0 0.0
    %486 = vmatpush1.msra.mxu0 0.0
    %487 = vmatprep.subr.mxu0 0.0
    %488 = vmatpush1.msra.mxu0 0.0
    %489 = vmatprep.subr.mxu0 0.0
    %490 = vmatpush1.msra.mxu0 0.0
    %491 = vmatprep.subr.mxu0 0.0
    %492 = vmatpush1.msra.mxu0 0.0
    %493 = vmatprep.subr.mxu0 0.0
    %494 = vmatpush1.msra.mxu0 0.0
    %495 = vmatprep.mubr.f32.mxu0 0.0
    %496 = vmatmul.mubr.f32.gmra.mrb[0].mxu0 %v384
    %v497 = vpop.f32.mrb[0].mxu0
    %v498 = vadd.f32 0.0, %v497
    %v499 = vpop.f32.mrb[0].mxu0
    %500 = vmatprep.mubr.f32.mxu0 0.0
    %501 = vmatmul.mubr.f32.gmra.mrb[0].mxu0 %v387
    %v502 = vpop.f32.mrb[0].mxu0
    %v503 = vadd.f32 0.0, %v502
    %v504 = vpop.f32.mrb[0].mxu0
    %505 = vmatprep.mubr.f32.mxu0 0.0
    %506 = vmatmul.mubr.f32.gmra.mrb[0].mxu0 %v390
    %v507 = vpop.f32.mrb[0].mxu0
    %v508 = vadd.f32 0.0, %v507
    %v509 = vpop.f32.mrb[0].mxu0
    %510 = vmatprep.mubr.f32.mxu0 0.0
    %511 = vmatmul.mubr.f32.gmra.mrb[0].mxu0 %v393
    %v512 = vpop.f32.mrb[0].mxu0
    %v513 = vadd.f32 0.0, %v512
    %v514 = vpop.f32.mrb[0].mxu0
    %515 = vmatprep.mubr.f32.mxu0 0.0
    %516 = vmatmul.mubr.f32.gmra.mrb[0].mxu0 %v396
    %v517 = vpop.f32.mrb[0].mxu0
    %v518 = vadd.f32 0.0, %v517
    %v519 = vpop.f32.mrb[0].mxu0
    %520 = vmatprep.mubr.f32.mxu0 0.0
    %521 = vmatmul.mubr.f32.gmra.mrb[0].mxu0 %v399
    %v522 = vpop.f32.mrb[0].mxu0
    %v523 = vadd.f32 0.0, %v522
    %v524 = vpop.f32.mrb[0].mxu0
    %525 = vmatprep.mubr.f32.mxu0 0.0
    %526 = vmatmul.mubr.f32.gmra.mrb[0].mxu0 %v402
    %v527 = vpop.f32.mrb[0].mxu0
    %v528 = vadd.f32 0.0, %v527
    %v529 = vpop.f32.mrb[0].mxu0
    %530 = vmatprep.mubr.f32.mxu0 0.0
    %531 = vmatmul.mubr.f32.gmra.mrb[0].mxu0 %v405
    %v532 = vpop.f32.mrb[0].mxu0
    %v533 = vadd.f32 0.0, %v532
    %v534 = vpop.f32.mrb[0].mxu0
    %535 = vmatprep.mubr.f32.mxu0 0.0
    %536 = vmatmul.mubr.f32.gmra.mrb[0].mxu0 %v408
    %v537 = vpop.f32.mrb[0].mxu0
    %v538 = vadd.f32 0.0, %v537
    %v539 = vpop.f32.mrb[0].mxu0
    %540 = vmatprep.mubr.f32.mxu0 0.0
    %541 = vmatmul.mubr.f32.gmra.mrb[0].mxu0 %v411
    %v542 = vpop.f32.mrb[0].mxu0
    %v543 = vadd.f32 0.0, %v542
    %v544 = vpop.f32.mrb[0].mxu0
    %545 = vmatprep.mubr.f32.mxu0 0.0
    %546 = vmatmul.mubr.f32.gmra.mrb[0].mxu0 %v414
    %v547 = vpop.f32.mrb[0].mxu0
    %v548 = vadd.f32 0.0, %v547
    %v549 = vpop.f32.mrb[0].mxu0
    %550 = vmatprep.mubr.f32.mxu0 0.0
    %551 = vmatmul.mubr.f32.gmra.mrb[0].mxu0 %v417
    %v552 = vpop.f32.mrb[0].mxu0
    %v553 = vadd.f32 0.0, %v552
    %v554 = vpop.f32.mrb[0].mxu0
    %555 = vmatprep.mubr.f32.mxu0 0.0
    %556 = vmatmul.mubr.f32.gmra.mrb[0].mxu0 %v420
    %v557 = vpop.f32.mrb[0].mxu0
    %v558 = vadd.f32 0.0, %v557
    %v559 = vpop.f32.mrb[0].mxu0
    %560 = vmatprep.mubr.f32.mxu0 0.0
    %561 = vmatmul.mubr.f32.gmra.mrb[0].mxu0 %v423
    %v562 = vpop.f32.mrb[0].mxu0
    %v563 = vadd.f32 0.0, %v562
    %v564 = vpop.f32.mrb[0].mxu0
    %565 = vmatprep.mubr.f32.mxu0 0.0
    %566 = vmatmul.mubr.f32.gmra.mrb[0].mxu0 %v426
    %v567 = vpop.f32.mrb[0].mxu0
    %v568 = vadd.f32 0.0, %v567
    %v569 = vpop.f32.mrb[0].mxu0
    %570 = vmatprep.mubr.f32.mxu0 0.0
    %571 = vmatmul.mubr.f32.gmra.mrb[0].mxu0 %v429
    %v572 = vpop.f32.mrb[0].mxu0
    %v573 = vadd.f32 0.0, %v572
    %v574 = vpop.f32.mrb[0].mxu0
    %575 = vdwg.mxu0
    %576 = vst.msk [vmem:[%s3] sm:$0xff] %vm43, %v498
    %577 = vst.msk [vmem:[%s3 + $0x8] sm:$0xff] %vm43, %v503
    %578 = vst.msk [vmem:[%s3 + $0x10] sm:$0xff] %vm43, %v508
    %579 = vst.msk [vmem:[%s3 + $0x18] sm:$0xff] %vm43, %v513
    %580 = vst.msk [vmem:[%s3 + $0x20] sm:$0xff] %vm43, %v518
    %581 = vst.msk [vmem:[%s3 + $0x28] sm:$0xff] %vm43, %v523
    %582 = vst.msk [vmem:[%s3 + $0x30] sm:$0xff] %vm43, %v528
    %583 = vst.msk [vmem:[%s3 + $0x38] sm:$0xff] %vm43, %v533
    %584 = vst.msk [vmem:[%s3 + $0x40] sm:$0xff] %vm43, %v538
    %585 = vst.msk [vmem:[%s3 + $0x48] sm:$0xff] %vm43, %v543
    %586 = vst.msk [vmem:[%s3 + $0x50] sm:$0xff] %vm43, %v548
    %587 = vst.msk [vmem:[%s3 + $0x58] sm:$0xff] %vm43, %v553
    %588 = vst.msk [vmem:[%s3 + $0x60] sm:$0xff] %vm43, %v558
    %589 = vst.msk [vmem:[%s3 + $0x68] sm:$0xff] %vm43, %v563
    %590 = vst.msk [vmem:[%s3 + $0x70] sm:$0xff] %vm43, %v568
    %591 = vst.msk [vmem:[%s3 + $0x78] sm:$0xff] %vm43, %v573
    %v592 = vlaneseq
    %v593 = vshrl.u32 %v592, 7
    %v594 = vsub.s32 %v334, %v593
    %v595 = vrot.slane %v287, %v594
    %v596 = vadd.s32 %v334, 4294967288
    %v597 = vlaneseq
    %v598 = vshrl.u32 %v597, 7
    %v599 = vsub.s32 %v596, %v598
    %v600 = vrot.slane %v290, %v599
    %vm601 = vcmask 130112
    %v602 = vsel %vm601, %v600, %v595
    %v603 = vadd.s32 %v334, 4294967280
    %v604 = vlaneseq
    %v605 = vshrl.u32 %v604, 7
    %v606 = vsub.s32 %v603, %v605
    %v607 = vrot.slane %v293, %v606
    %vm608 = vcmask 195712
    %v609 = vsel %vm608, %v607, %v602
    %v610 = vadd.s32 %v334, 4294967272
    %v611 = vlaneseq
    %v612 = vshrl.u32 %v611, 7
    %v613 = vsub.s32 %v610, %v612
    %v614 = vrot.slane %v296, %v613
    %vm615 = vcmask 261312
    %v616 = vsel %vm615, %v614, %v609
    %v617 = vadd.s32 %v334, 4294967264
    %v618 = vlaneseq
    %v619 = vshrl.u32 %v618, 7
    %v620 = vsub.s32 %v617, %v619
    %v621 = vrot.slane %v299, %v620
    %vm622 = vcmask 326912
    %v623 = vsel %vm622, %v621, %v616
    %v624 = vadd.s32 %v334, 4294967256
    %v625 = vlaneseq
    %v626 = vshrl.u32 %v625, 7
    %v627 = vsub.s32 %v624, %v626
    %v628 = vrot.slane %v302, %v627
    %vm629 = vcmask 392512
    %v630 = vsel %vm629, %v628, %v623
    %v631 = vadd.s32 %v334, 4294967248
    %v632 = vlaneseq
    %v633 = vshrl.u32 %v632, 7
    %v634 = vsub.s32 %v631, %v633
    %v635 = vrot.slane %v305, %v634
    %vm636 = vcmask 458112
    %v637 = vsel %vm636, %v635, %v630
    %v638 = vadd.s32 %v334, 4294967240
    %v639 = vlaneseq
    %v640 = vshrl.u32 %v639, 7
    %v641 = vsub.s32 %v638, %v640
    %v642 = vrot.slane %v308, %v641
    %vm643 = vcmask 523712
    %v644 = vsel %vm643, %v642, %v637
    %v645 = vadd.s32 %v334, 4294967232
    %v646 = vlaneseq
    %v647 = vshrl.u32 %v646, 7
    %v648 = vsub.s32 %v645, %v647
    %v649 = vrot.slane %v311, %v648
    %vm650 = vcmask 589312
    %v651 = vsel %vm650, %v649, %v644
    %v652 = vadd.s32 %v334, 4294967224
    %v653 = vlaneseq
    %v654 = vshrl.u32 %v653, 7
    %v655 = vsub.s32 %v652, %v654
    %v656 = vrot.slane %v314, %v655
    %vm657 = vcmask 654912
    %v658 = vsel %vm657, %v656, %v651
    %v659 = vadd.s32 %v334, 4294967216
    %v660 = vlaneseq
    %v661 = vshrl.u32 %v660, 7
    %v662 = vsub.s32 %v659, %v661
    %v663 = vrot.slane %v317, %v662
    %vm664 = vcmask 720512
    %v665 = vsel %vm664, %v663, %v658
    %v666 = vadd.s32 %v334, 4294967208
    %v667 = vlaneseq
    %v668 = vshrl.u32 %v667, 7
    %v669 = vsub.s32 %v666, %v668
    %v670 = vrot.slane %v320, %v669
    %vm671 = vcmask 786112
    %v672 = vsel %vm671, %v670, %v665
    %v673 = vadd.s32 %v334, 4294967200
    %v674 = vlaneseq
    %v675 = vshrl.u32 %v674, 7
    %v676 = vsub.s32 %v673, %v675
    %v677 = vrot.slane %v323, %v676
    %vm678 = vcmask 851712
    %v679 = vsel %vm678, %v677, %v672
    %v680 = vadd.s32 %v334, 4294967192
    %v681 = vlaneseq
    %v682 = vshrl.u32 %v681, 7
    %v683 = vsub.s32 %v680, %v682
    %v684 = vrot.slane %v326, %v683
    %vm685 = vcmask 917312
    %v686 = vsel %vm685, %v684, %v679
    %v687 = vadd.s32 %v334, 4294967184
    %v688 = vlaneseq
    %v689 = vshrl.u32 %v688, 7
    %v690 = vsub.s32 %v687, %v689
    %v691 = vrot.slane %v329, %v690
    %vm692 = vcmask 982912
    %v693 = vsel %vm692, %v691, %v686
    %v694 = vadd.s32 %v334, 4294967176
    %v695 = vlaneseq
    %v696 = vshrl.u32 %v695, 7
    %v697 = vsub.s32 %v694, %v696
    %v698 = vrot.slane %v332, %v697
    %vm699 = vcmask 1048512
    %v700 = vsel %vm699, %v698, %v693
    %701 = vst [vmem:[#allocation2] sm:$0x1] %v700
    %v702 = vsel %vm284, %v367, 0.0
    %v703 = vsel %vm284, %v368, 0.0
    %v704 = vadd.f32 %v702, %v703
    %v705 = vsel %vm284, %v369, 0.0
    %v706 = vadd.f32 %v704, %v705
    %v707 = vsel %vm284, %v370, 0.0
    %v708 = vadd.f32 %v706, %v707
    %v709 = vsel %vm284, %v371, 0.0
    %v710 = vadd.f32 %v708, %v709
    %v711 = vsel %vm284, %v372, 0.0
    %v712 = vadd.f32 %v710, %v711
    %v713 = vsel %vm284, %v373, 0.0
    %v714 = vadd.f32 %v712, %v713
    %v715 = vsel %vm284, %v374, 0.0
    %v716 = vadd.f32 %v714, %v715
    %v717 = vsel %vm284, %v375, 0.0
    %v718 = vadd.f32 %v716, %v717
    %v719 = vsel %vm284, %v376, 0.0
    %v720 = vadd.f32 %v718, %v719
    %v721 = vsel %vm284, %v377, 0.0
    %v722 = vadd.f32 %v720, %v721
    %v723 = vsel %vm284, %v378, 0.0
    %v724 = vadd.f32 %v722, %v723
    %v725 = vsel %vm284, %v379, 0.0
    %v726 = vadd.f32 %v724, %v725
    %v727 = vsel %vm284, %v380, 0.0
    %v728 = vadd.f32 %v726, %v727
    %v729 = vsel %vm284, %v381, 0.0
    %v730 = vadd.f32 %v728, %v729
    %v731 = vsel %vm284, %v382, 0.0
    %v732 = vadd.f32 %v730, %v731
    %v733 = vrot.slane %v732, 4
    %v734 = vadd.f32 %v732, %v733
    %v735 = vrot.slane %v734, 2
    %v736 = vadd.f32 %v734, %v735
    %v737 = vrot.slane %v736, 1
    %v738 = vadd.f32 %v736, %v737
    %vm739 = vcmask 516096
    %740 = vst.msk [vmem:[#allocation4] sm:$0x1] %vm739, %v738
    // Predicated region
    $region14: #{tpu_custom_call.1} parent=1 // pred_check
      _
    $region15: #{tpu_custom_call.1} parent=1 // pred_check_branch
      %742 = sbr.rel (0) target = $region17
    $region16: #{tpu_custom_call.1} parent=1 // pred_region
      _
    $region17: #{tpu_custom_call.1} parent=1 // pred_fallthru
      _
    // Predicated region
    $region18: #{tpu_custom_call.1} parent=1 // pred_check
      _
    $region19: #{tpu_custom_call.1} parent=1 // pred_check_branch
      %744 = sbr.rel (0) target = $region21
    $region20: #{tpu_custom_call.1} parent=1 // pred_region
      %s746 = ssub.s32 16, 16
      %747 = vsyncadd [#allocation3], %s746
      %s749 = sshll.u32 [#allocation2], 4
      %s750 = int_to_ptr.vmem [resolvable:$true] %s749
      %752 = dma.vmem_to_hbm [thread:$0]  %s750, 16, %s4, [#allocation3]
    $region21: #{tpu_custom_call.1} parent=1 // pred_fallthru
      _
    // Predicated region
    $region22: #{tpu_custom_call.1} parent=1 // pred_check
      _
    $region23: #{tpu_custom_call.1} parent=1 // pred_check_branch
      %754 = sbr.rel (0) target = $region25
    $region24: #{tpu_custom_call.1} parent=1 // pred_region
      %s756 = ssub.s32 16, 16
      %757 = vsyncadd [#allocation5], %s756
      %s759 = sshll.u32 [#allocation4], 4
      %s760 = int_to_ptr.vmem [resolvable:$true] %s759
      %762 = dma.vmem_to_hbm [thread:$0]  %s760, 16, %s5, [#allocation5]
    $region25: #{tpu_custom_call.1} parent=1 // pred_fallthru
      _
    // Predicated region
    $region26: #{tpu_custom_call.1} parent=1 // pred_check
      _
    $region27: #{tpu_custom_call.1} parent=1 // pred_check_branch
      %764 = sbr.rel (0) target = $region29
    $region28: #{tpu_custom_call.1} parent=1 // pred_region
      _
    $region29: #{tpu_custom_call.1} parent=1 // pred_fallthru
      _
    // Predicated region
    $region30: #{tpu_custom_call.1} parent=1 // pred_check
      _
    $region31: #{tpu_custom_call.1} parent=1 // pred_check_branch
      %766 = sbr.rel (0) target = $region33
    $region32: #{tpu_custom_call.1} parent=1 // pred_region
      %767 = dma.done [#allocation3], 16
    $region33: #{tpu_custom_call.1} parent=1 // pred_fallthru
      _
    // Predicated region
    $region34: #{tpu_custom_call.1} parent=1 // pred_check
      _
    $region35: #{tpu_custom_call.1} parent=1 // pred_check_branch
      %769 = sbr.rel (0) target = $region37
    $region36: #{tpu_custom_call.1} parent=1 // pred_region
      %770 = dma.done [#allocation5], 16
    $region37: #{tpu_custom_call.1} parent=1 // pred_fallthru
      _
    %771 = vsyncpa [#allocation3], 1
    %772 = vsyncpa [#allocation5], 1

</llo_original>
